<compile_context>
chip_gen: v6e
topology: v6e:2x2x1
jax: 0.10.0
libtpu: 0.0.40
codegen_flags: <defaults>
</compile_context>

<pallas_src>
import functools

import jax
import jax.numpy as jnp
from jax.experimental import pallas as pl
from jax.experimental.pallas import tpu as pltpu  # noqa: F401  (kept for parity / future tiling)


def _lstm_regressor_kernel(x_ref, wih_ref, whh_ref, b_ref, fcw_ref, fcb_ref,
                           out_ref, *, batch, seq_len, hidden):
    B, T, H = batch, seq_len, hidden

    # ---- Hoisted input projection (no sequential dependence) --------------
    # One batched MXU matmul: (T*B, E) @ (E, 4H) + fused bias; result stays in
    # vregs (tiny) rather than VMEM scratch.
    xp = (jnp.dot(x_ref[...], wih_ref[...], preferred_element_type=jnp.float32)
          + b_ref[...])                                   # (T*B, 4H)

    whh = whh_ref[...]                                    # (H, 4H), hoisted load

    # ---- Recurrence: fully unrolled, state carried in vregs ---------------
    h = jnp.zeros((B, H), jnp.float32)
    c = jnp.zeros((B, H), jnp.float32)
    acc = jnp.zeros((B, H), jnp.float32)
    for t in range(T):        # T static & small -> full unroll, static slices
        x_t = xp[t * B:(t + 1) * B, :]                    # (B, 4H), static slice
        gates = x_t + jnp.dot(h, whh, preferred_element_type=jnp.float32)
        i_g = jax.nn.sigmoid(gates[:, 0 * H:1 * H])
        f_g = jax.nn.sigmoid(gates[:, 1 * H:2 * H])
        g_g = jnp.tanh(gates[:, 2 * H:3 * H])
        o_g = jax.nn.sigmoid(gates[:, 3 * H:4 * H])
        c = f_g * c + i_g * g_g
        h = o_g * jnp.tanh(c)
        acc = acc + h                                     # running sum for avg pool

    pooled = acc * (1.0 / T)                              # mean over seq dim
    # Final 1-wide FC: VPU multiply + lane reduction (avoid an N=1 MXU matmul).
    out_ref[...] = (jnp.sum(pooled * fcw_ref[...], axis=-1, keepdims=True)
                    + fcb_ref[...])


def rnn_regressor_forward(x_btE, w_ih, w_hh, b_ih, b_hh, fc_w, fc_b):
    """x_btE: (B, T, E) float32, batch_first like PyTorch. Returns (B, 1)."""
    B, T, E = x_btE.shape
    H4 = w_ih.shape[0]
    H = H4 // 4

    # Time-major flatten so each timestep's rows are a contiguous static slice
    # inside the kernel (no strided sublane loads). The wrapper-side transpose
    # of a (2, 8, 200) array is negligible.
    x_tb = jnp.transpose(x_btE, (1, 0, 2)).reshape(T * B, E)
    wih_t = jnp.transpose(w_ih)                 # (E, 4H)
    whh_t = jnp.transpose(w_hh)                 # (H, 4H)
    b = (b_ih + b_hh).reshape(1, 4 * H)         # fused bias, added once
    fcw = fc_w.reshape(1, H)
    fcb = fc_b.reshape(1, 1)

    kernel = functools.partial(_lstm_regressor_kernel,
                               batch=B, seq_len=T, hidden=H)

    # No grid: all operands are tiny and live whole in VMEM; the recurrence is
    # an unrolled in-kernel loop with h/c/sum carried in vregs.
    # TODO(synk): for real workloads, tile the batch to 128/256 rows on a
    # "parallel" grid axis, chunk T when (T*B)*(E + 4H)*4 bytes exceeds the
    # VMEM budget (64 MiB/TC on v7x), and feed bf16 matmul inputs on v6e/v7x.
    return pl.pallas_call(
        kernel,
        out_shape=jax.ShapeDtypeStruct((B, 1), jnp.float32),
    )(x_tb, wih_t, whh_t, b, fcw, fcb)


def _reference_forward(x, w_ih, w_hh, b_ih, b_hh, fc_w, fc_b):
    """Pure-JAX reference matching PyTorch nn.LSTM + mean-pool + Linear."""
    B, T, E = x.shape
    H = w_hh.shape[1]
    h = jnp.zeros((B, H), jnp.float32)
    c = jnp.zeros((B, H), jnp.float32)
    outs = []
    for t in range(T):
        gates = x[:, t] @ w_ih.T + b_ih + h @ w_hh.T + b_hh
        i = jax.nn.sigmoid(gates[:, 0 * H:1 * H])
        f = jax.nn.sigmoid(gates[:, 1 * H:2 * H])
        g = jnp.tanh(gates[:, 2 * H:3 * H])
        o = jax.nn.sigmoid(gates[:, 3 * H:4 * H])
        c = f * c + i * g
        h = o * jnp.tanh(c)
        outs.append(h)
    pooled = jnp.stack(outs, axis=1).mean(axis=1)
    return pooled @ fc_w.T + fc_b


if __name__ == "__main__":
    embd_dim = 200
    hidden_dim = 32
    B, T = 2, 8

    key = jax.random.PRNGKey(0)
    ks = jax.random.split(key, 8)
    scale = 1.0 / jnp.sqrt(hidden_dim)

    x = jax.random.normal(ks[0], (B, T, embd_dim), jnp.float32)
    w_ih = jax.random.uniform(ks[1], (4 * hidden_dim, embd_dim), jnp.float32, -scale, scale)
    w_hh = jax.random.uniform(ks[2], (4 * hidden_dim, hidden_dim), jnp.float32, -scale, scale)
    b_ih = jax.random.uniform(ks[3], (4 * hidden_dim,), jnp.float32, -scale, scale)
    b_hh = jax.random.uniform(ks[4], (4 * hidden_dim,), jnp.float32, -scale, scale)
    fc_w = jax.random.uniform(ks[5], (1, hidden_dim), jnp.float32, -scale, scale)
    fc_b = jax.random.uniform(ks[6], (1,), jnp.float32, -scale, scale)

    y = rnn_regressor_forward(x, w_ih, w_hh, b_ih, b_hh, fc_w, fc_b)
    y = jax.block_until_ready(y)

    y_ref = _reference_forward(x, w_ih, w_hh, b_ih, b_hh, fc_w, fc_b)
    assert y.shape == (B, 1)
    assert jnp.allclose(y, y_ref, atol=1e-5, rtol=1e-5)

    print("KERNEL_OK")
</pallas_src>

<mosaic_0001>
module attributes {stable_mosaic.version = 11 : i64} {
  func.func @_lstm_regressor_kernel(%arg0: memref<16x200xf32, #tpu.memory_space<vmem>>, %arg1: memref<200x128xf32, #tpu.memory_space<vmem>>, %arg2: memref<32x128xf32, #tpu.memory_space<vmem>>, %arg3: memref<1x128xf32, #tpu.memory_space<vmem>>, %arg4: memref<1x32xf32, #tpu.memory_space<vmem>>, %arg5: memref<1x1xf32, #tpu.memory_space<vmem>>, %arg6: memref<2x1xf32, #tpu.memory_space<vmem>>) attributes {dimension_semantics = [], scalar_prefetch = 0 : i64, scratch_operands = 0 : i64, tpu.core_type = #tpu.core_type<tc>} {
    %c0 = arith.constant 0 : index
    %c0_0 = arith.constant 0 : index
    %0 = vector.load %arg0[%c0, %c0_0] : memref<16x200xf32, #tpu.memory_space<vmem>>, vector<16x200xf32>
    %c0_1 = arith.constant 0 : index
    %c0_2 = arith.constant 0 : index
    %1 = vector.load %arg1[%c0_1, %c0_2] : memref<200x128xf32, #tpu.memory_space<vmem>>, vector<200x128xf32>
    %cst = arith.constant dense<0.000000e+00> : vector<16x128xf32>
    %2 = tpu.matmul %0, %1, %cst {dimension_numbers = #tpu.dot_dimension_numbers<[1], [0], [0], [1], [0, 0, 1, 1], [], []>} : vector<16x200xf32>, vector<200x128xf32>, vector<16x128xf32> -> vector<16x128xf32>
    %c0_3 = arith.constant 0 : index
    %c0_4 = arith.constant 0 : index
    %3 = vector.load %arg3[%c0_3, %c0_4] : memref<1x128xf32, #tpu.memory_space<vmem>>, vector<1x128xf32>
    %4 = vector.broadcast %3 : vector<1x128xf32> to vector<16x128xf32>
    %5 = arith.addf %2, %4 : vector<16x128xf32>
    %c0_5 = arith.constant 0 : index
    %c0_6 = arith.constant 0 : index
    %6 = vector.load %arg2[%c0_5, %c0_6] : memref<32x128xf32, #tpu.memory_space<vmem>>, vector<32x128xf32>
    %cst_7 = arith.constant 0.000000e+00 : f32
    %7 = vector.broadcast %cst_7 : f32 to vector<2x32xf32>
    %cst_8 = arith.constant 0.000000e+00 : f32
    %8 = vector.broadcast %cst_8 : f32 to vector<2x32xf32>
    %cst_9 = arith.constant 0.000000e+00 : f32
    %9 = vector.broadcast %cst_9 : f32 to vector<2x32xf32>
    %10 = vector.extract_strided_slice %5 {offsets = [0, 0], sizes = [2, 128], strides = [1, 1]} : vector<16x128xf32> to vector<2x128xf32>
    %cst_10 = arith.constant dense<0.000000e+00> : vector<2x128xf32>
    %11 = tpu.matmul %7, %6, %cst_10 {dimension_numbers = #tpu.dot_dimension_numbers<[1], [0], [0], [1], [0, 0, 1, 1], [], []>} : vector<2x32xf32>, vector<32x128xf32>, vector<2x128xf32> -> vector<2x128xf32>
    %12 = arith.addf %10, %11 : vector<2x128xf32>
    %13 = vector.extract_strided_slice %12 {offsets = [0, 0], sizes = [2, 32], strides = [1, 1]} : vector<2x128xf32> to vector<2x32xf32>
    %14 = arith.negf %13 : vector<2x32xf32>
    %15 = math.exp %14 : vector<2x32xf32>
    %cst_11 = arith.constant 1.000000e+00 : f32
    %16 = vector.broadcast %cst_11 : f32 to vector<2x32xf32>
    %17 = arith.addf %16, %15 : vector<2x32xf32>
    %18 = arith.divf %16, %17 : vector<2x32xf32>
    %19 = vector.extract_strided_slice %12 {offsets = [0, 32], sizes = [2, 32], strides = [1, 1]} : vector<2x128xf32> to vector<2x32xf32>
    %20 = arith.negf %19 : vector<2x32xf32>
    %21 = math.exp %20 : vector<2x32xf32>
    %cst_12 = arith.constant 1.000000e+00 : f32
    %22 = vector.broadcast %cst_12 : f32 to vector<2x32xf32>
    %23 = arith.addf %22, %21 : vector<2x32xf32>
    %24 = arith.divf %22, %23 : vector<2x32xf32>
    %25 = vector.extract_strided_slice %12 {offsets = [0, 64], sizes = [2, 32], strides = [1, 1]} : vector<2x128xf32> to vector<2x32xf32>
    %26 = math.tanh %25 : vector<2x32xf32>
    %27 = vector.extract_strided_slice %12 {offsets = [0, 96], sizes = [2, 32], strides = [1, 1]} : vector<2x128xf32> to vector<2x32xf32>
    %28 = arith.negf %27 : vector<2x32xf32>
    %29 = math.exp %28 : vector<2x32xf32>
    %cst_13 = arith.constant 1.000000e+00 : f32
    %30 = vector.broadcast %cst_13 : f32 to vector<2x32xf32>
    %31 = arith.addf %30, %29 : vector<2x32xf32>
    %32 = arith.divf %30, %31 : vector<2x32xf32>
    %33 = arith.mulf %24, %8 : vector<2x32xf32>
    %34 = arith.mulf %18, %26 : vector<2x32xf32>
    %35 = arith.addf %33, %34 : vector<2x32xf32>
    %36 = math.tanh %35 : vector<2x32xf32>
    %37 = arith.mulf %32, %36 : vector<2x32xf32>
    %38 = arith.addf %9, %37 : vector<2x32xf32>
    %39 = vector.extract_strided_slice %5 {offsets = [2, 0], sizes = [2, 128], strides = [1, 1]} : vector<16x128xf32> to vector<2x128xf32>
    %cst_14 = arith.constant dense<0.000000e+00> : vector<2x128xf32>
    %40 = tpu.matmul %37, %6, %cst_14 {dimension_numbers = #tpu.dot_dimension_numbers<[1], [0], [0], [1], [0, 0, 1, 1], [], []>} : vector<2x32xf32>, vector<32x128xf32>, vector<2x128xf32> -> vector<2x128xf32>
    %41 = arith.addf %39, %40 : vector<2x128xf32>
    %42 = vector.extract_strided_slice %41 {offsets = [0, 0], sizes = [2, 32], strides = [1, 1]} : vector<2x128xf32> to vector<2x32xf32>
    %43 = arith.negf %42 : vector<2x32xf32>
    %44 = math.exp %43 : vector<2x32xf32>
    %cst_15 = arith.constant 1.000000e+00 : f32
    %45 = vector.broadcast %cst_15 : f32 to vector<2x32xf32>
    %46 = arith.addf %45, %44 : vector<2x32xf32>
    %47 = arith.divf %45, %46 : vector<2x32xf32>
    %48 = vector.extract_strided_slice %41 {offsets = [0, 32], sizes = [2, 32], strides = [1, 1]} : vector<2x128xf32> to vector<2x32xf32>
    %49 = arith.negf %48 : vector<2x32xf32>
    %50 = math.exp %49 : vector<2x32xf32>
    %cst_16 = arith.constant 1.000000e+00 : f32
    %51 = vector.broadcast %cst_16 : f32 to vector<2x32xf32>
    %52 = arith.addf %51, %50 : vector<2x32xf32>
    %53 = arith.divf %51, %52 : vector<2x32xf32>
    %54 = vector.extract_strided_slice %41 {offsets = [0, 64], sizes = [2, 32], strides = [1, 1]} : vector<2x128xf32> to vector<2x32xf32>
    %55 = math.tanh %54 : vector<2x32xf32>
    %56 = vector.extract_strided_slice %41 {offsets = [0, 96], sizes = [2, 32], strides = [1, 1]} : vector<2x128xf32> to vector<2x32xf32>
    %57 = arith.negf %56 : vector<2x32xf32>
    %58 = math.exp %57 : vector<2x32xf32>
    %cst_17 = arith.constant 1.000000e+00 : f32
    %59 = vector.broadcast %cst_17 : f32 to vector<2x32xf32>
    %60 = arith.addf %59, %58 : vector<2x32xf32>
    %61 = arith.divf %59, %60 : vector<2x32xf32>
    %62 = arith.mulf %53, %35 : vector<2x32xf32>
    %63 = arith.mulf %47, %55 : vector<2x32xf32>
    %64 = arith.addf %62, %63 : vector<2x32xf32>
    %65 = math.tanh %64 : vector<2x32xf32>
    %66 = arith.mulf %61, %65 : vector<2x32xf32>
    %67 = arith.addf %38, %66 : vector<2x32xf32>
    %68 = vector.extract_strided_slice %5 {offsets = [4, 0], sizes = [2, 128], strides = [1, 1]} : vector<16x128xf32> to vector<2x128xf32>
    %cst_18 = arith.constant dense<0.000000e+00> : vector<2x128xf32>
    %69 = tpu.matmul %66, %6, %cst_18 {dimension_numbers = #tpu.dot_dimension_numbers<[1], [0], [0], [1], [0, 0, 1, 1], [], []>} : vector<2x32xf32>, vector<32x128xf32>, vector<2x128xf32> -> vector<2x128xf32>
    %70 = arith.addf %68, %69 : vector<2x128xf32>
    %71 = vector.extract_strided_slice %70 {offsets = [0, 0], sizes = [2, 32], strides = [1, 1]} : vector<2x128xf32> to vector<2x32xf32>
    %72 = arith.negf %71 : vector<2x32xf32>
    %73 = math.exp %72 : vector<2x32xf32>
    %cst_19 = arith.constant 1.000000e+00 : f32
    %74 = vector.broadcast %cst_19 : f32 to vector<2x32xf32>
    %75 = arith.addf %74, %73 : vector<2x32xf32>
    %76 = arith.divf %74, %75 : vector<2x32xf32>
    %77 = vector.extract_strided_slice %70 {offsets = [0, 32], sizes = [2, 32], strides = [1, 1]} : vector<2x128xf32> to vector<2x32xf32>
    %78 = arith.negf %77 : vector<2x32xf32>
    %79 = math.exp %78 : vector<2x32xf32>
    %cst_20 = arith.constant 1.000000e+00 : f32
    %80 = vector.broadcast %cst_20 : f32 to vector<2x32xf32>
    %81 = arith.addf %80, %79 : vector<2x32xf32>
    %82 = arith.divf %80, %81 : vector<2x32xf32>
    %83 = vector.extract_strided_slice %70 {offsets = [0, 64], sizes = [2, 32], strides = [1, 1]} : vector<2x128xf32> to vector<2x32xf32>
    %84 = math.tanh %83 : vector<2x32xf32>
    %85 = vector.extract_strided_slice %70 {offsets = [0, 96], sizes = [2, 32], strides = [1, 1]} : vector<2x128xf32> to vector<2x32xf32>
    %86 = arith.negf %85 : vector<2x32xf32>
    %87 = math.exp %86 : vector<2x32xf32>
    %cst_21 = arith.constant 1.000000e+00 : f32
    %88 = vector.broadcast %cst_21 : f32 to vector<2x32xf32>
    %89 = arith.addf %88, %87 : vector<2x32xf32>
    %90 = arith.divf %88, %89 : vector<2x32xf32>
    %91 = arith.mulf %82, %64 : vector<2x32xf32>
    %92 = arith.mulf %76, %84 : vector<2x32xf32>
    %93 = arith.addf %91, %92 : vector<2x32xf32>
    %94 = math.tanh %93 : vector<2x32xf32>
    %95 = arith.mulf %90, %94 : vector<2x32xf32>
    %96 = arith.addf %67, %95 : vector<2x32xf32>
    %97 = vector.extract_strided_slice %5 {offsets = [6, 0], sizes = [2, 128], strides = [1, 1]} : vector<16x128xf32> to vector<2x128xf32>
    %cst_22 = arith.constant dense<0.000000e+00> : vector<2x128xf32>
    %98 = tpu.matmul %95, %6, %cst_22 {dimension_numbers = #tpu.dot_dimension_numbers<[1], [0], [0], [1], [0, 0, 1, 1], [], []>} : vector<2x32xf32>, vector<32x128xf32>, vector<2x128xf32> -> vector<2x128xf32>
    %99 = arith.addf %97, %98 : vector<2x128xf32>
    %100 = vector.extract_strided_slice %99 {offsets = [0, 0], sizes = [2, 32], strides = [1, 1]} : vector<2x128xf32> to vector<2x32xf32>
    %101 = arith.negf %100 : vector<2x32xf32>
    %102 = math.exp %101 : vector<2x32xf32>
    %cst_23 = arith.constant 1.000000e+00 : f32
    %103 = vector.broadcast %cst_23 : f32 to vector<2x32xf32>
    %104 = arith.addf %103, %102 : vector<2x32xf32>
    %105 = arith.divf %103, %104 : vector<2x32xf32>
    %106 = vector.extract_strided_slice %99 {offsets = [0, 32], sizes = [2, 32], strides = [1, 1]} : vector<2x128xf32> to vector<2x32xf32>
    %107 = arith.negf %106 : vector<2x32xf32>
    %108 = math.exp %107 : vector<2x32xf32>
    %cst_24 = arith.constant 1.000000e+00 : f32
    %109 = vector.broadcast %cst_24 : f32 to vector<2x32xf32>
    %110 = arith.addf %109, %108 : vector<2x32xf32>
    %111 = arith.divf %109, %110 : vector<2x32xf32>
    %112 = vector.extract_strided_slice %99 {offsets = [0, 64], sizes = [2, 32], strides = [1, 1]} : vector<2x128xf32> to vector<2x32xf32>
    %113 = math.tanh %112 : vector<2x32xf32>
    %114 = vector.extract_strided_slice %99 {offsets = [0, 96], sizes = [2, 32], strides = [1, 1]} : vector<2x128xf32> to vector<2x32xf32>
    %115 = arith.negf %114 : vector<2x32xf32>
    %116 = math.exp %115 : vector<2x32xf32>
    %cst_25 = arith.constant 1.000000e+00 : f32
    %117 = vector.broadcast %cst_25 : f32 to vector<2x32xf32>
    %118 = arith.addf %117, %116 : vector<2x32xf32>
    %119 = arith.divf %117, %118 : vector<2x32xf32>
    %120 = arith.mulf %111, %93 : vector<2x32xf32>
    %121 = arith.mulf %105, %113 : vector<2x32xf32>
    %122 = arith.addf %120, %121 : vector<2x32xf32>
    %123 = math.tanh %122 : vector<2x32xf32>
    %124 = arith.mulf %119, %123 : vector<2x32xf32>
    %125 = arith.addf %96, %124 : vector<2x32xf32>
    %126 = vector.extract_strided_slice %5 {offsets = [8, 0], sizes = [2, 128], strides = [1, 1]} : vector<16x128xf32> to vector<2x128xf32>
    %cst_26 = arith.constant dense<0.000000e+00> : vector<2x128xf32>
    %127 = tpu.matmul %124, %6, %cst_26 {dimension_numbers = #tpu.dot_dimension_numbers<[1], [0], [0], [1], [0, 0, 1, 1], [], []>} : vector<2x32xf32>, vector<32x128xf32>, vector<2x128xf32> -> vector<2x128xf32>
    %128 = arith.addf %126, %127 : vector<2x128xf32>
    %129 = vector.extract_strided_slice %128 {offsets = [0, 0], sizes = [2, 32], strides = [1, 1]} : vector<2x128xf32> to vector<2x32xf32>
    %130 = arith.negf %129 : vector<2x32xf32>
    %131 = math.exp %130 : vector<2x32xf32>
    %cst_27 = arith.constant 1.000000e+00 : f32
    %132 = vector.broadcast %cst_27 : f32 to vector<2x32xf32>
    %133 = arith.addf %132, %131 : vector<2x32xf32>
    %134 = arith.divf %132, %133 : vector<2x32xf32>
    %135 = vector.extract_strided_slice %128 {offsets = [0, 32], sizes = [2, 32], strides = [1, 1]} : vector<2x128xf32> to vector<2x32xf32>
    %136 = arith.negf %135 : vector<2x32xf32>
    %137 = math.exp %136 : vector<2x32xf32>
    %cst_28 = arith.constant 1.000000e+00 : f32
    %138 = vector.broadcast %cst_28 : f32 to vector<2x32xf32>
    %139 = arith.addf %138, %137 : vector<2x32xf32>
    %140 = arith.divf %138, %139 : vector<2x32xf32>
    %141 = vector.extract_strided_slice %128 {offsets = [0, 64], sizes = [2, 32], strides = [1, 1]} : vector<2x128xf32> to vector<2x32xf32>
    %142 = math.tanh %141 : vector<2x32xf32>
    %143 = vector.extract_strided_slice %128 {offsets = [0, 96], sizes = [2, 32], strides = [1, 1]} : vector<2x128xf32> to vector<2x32xf32>
    %144 = arith.negf %143 : vector<2x32xf32>
    %145 = math.exp %144 : vector<2x32xf32>
    %cst_29 = arith.constant 1.000000e+00 : f32
    %146 = vector.broadcast %cst_29 : f32 to vector<2x32xf32>
    %147 = arith.addf %146, %145 : vector<2x32xf32>
    %148 = arith.divf %146, %147 : vector<2x32xf32>
    %149 = arith.mulf %140, %122 : vector<2x32xf32>
    %150 = arith.mulf %134, %142 : vector<2x32xf32>
    %151 = arith.addf %149, %150 : vector<2x32xf32>
    %152 = math.tanh %151 : vector<2x32xf32>
    %153 = arith.mulf %148, %152 : vector<2x32xf32>
    %154 = arith.addf %125, %153 : vector<2x32xf32>
    %155 = vector.extract_strided_slice %5 {offsets = [10, 0], sizes = [2, 128], strides = [1, 1]} : vector<16x128xf32> to vector<2x128xf32>
    %cst_30 = arith.constant dense<0.000000e+00> : vector<2x128xf32>
    %156 = tpu.matmul %153, %6, %cst_30 {dimension_numbers = #tpu.dot_dimension_numbers<[1], [0], [0], [1], [0, 0, 1, 1], [], []>} : vector<2x32xf32>, vector<32x128xf32>, vector<2x128xf32> -> vector<2x128xf32>
    %157 = arith.addf %155, %156 : vector<2x128xf32>
    %158 = vector.extract_strided_slice %157 {offsets = [0, 0], sizes = [2, 32], strides = [1, 1]} : vector<2x128xf32> to vector<2x32xf32>
    %159 = arith.negf %158 : vector<2x32xf32>
    %160 = math.exp %159 : vector<2x32xf32>
    %cst_31 = arith.constant 1.000000e+00 : f32
    %161 = vector.broadcast %cst_31 : f32 to vector<2x32xf32>
    %162 = arith.addf %161, %160 : vector<2x32xf32>
    %163 = arith.divf %161, %162 : vector<2x32xf32>
    %164 = vector.extract_strided_slice %157 {offsets = [0, 32], sizes = [2, 32], strides = [1, 1]} : vector<2x128xf32> to vector<2x32xf32>
    %165 = arith.negf %164 : vector<2x32xf32>
    %166 = math.exp %165 : vector<2x32xf32>
    %cst_32 = arith.constant 1.000000e+00 : f32
    %167 = vector.broadcast %cst_32 : f32 to vector<2x32xf32>
    %168 = arith.addf %167, %166 : vector<2x32xf32>
    %169 = arith.divf %167, %168 : vector<2x32xf32>
    %170 = vector.extract_strided_slice %157 {offsets = [0, 64], sizes = [2, 32], strides = [1, 1]} : vector<2x128xf32> to vector<2x32xf32>
    %171 = math.tanh %170 : vector<2x32xf32>
    %172 = vector.extract_strided_slice %157 {offsets = [0, 96], sizes = [2, 32], strides = [1, 1]} : vector<2x128xf32> to vector<2x32xf32>
    %173 = arith.negf %172 : vector<2x32xf32>
    %174 = math.exp %173 : vector<2x32xf32>
    %cst_33 = arith.constant 1.000000e+00 : f32
    %175 = vector.broadcast %cst_33 : f32 to vector<2x32xf32>
    %176 = arith.addf %175, %174 : vector<2x32xf32>
    %177 = arith.divf %175, %176 : vector<2x32xf32>
    %178 = arith.mulf %169, %151 : vector<2x32xf32>
    %179 = arith.mulf %163, %171 : vector<2x32xf32>
    %180 = arith.addf %178, %179 : vector<2x32xf32>
    %181 = math.tanh %180 : vector<2x32xf32>
    %182 = arith.mulf %177, %181 : vector<2x32xf32>
    %183 = arith.addf %154, %182 : vector<2x32xf32>
    %184 = vector.extract_strided_slice %5 {offsets = [12, 0], sizes = [2, 128], strides = [1, 1]} : vector<16x128xf32> to vector<2x128xf32>
    %cst_34 = arith.constant dense<0.000000e+00> : vector<2x128xf32>
    %185 = tpu.matmul %182, %6, %cst_34 {dimension_numbers = #tpu.dot_dimension_numbers<[1], [0], [0], [1], [0, 0, 1, 1], [], []>} : vector<2x32xf32>, vector<32x128xf32>, vector<2x128xf32> -> vector<2x128xf32>
    %186 = arith.addf %184, %185 : vector<2x128xf32>
    %187 = vector.extract_strided_slice %186 {offsets = [0, 0], sizes = [2, 32], strides = [1, 1]} : vector<2x128xf32> to vector<2x32xf32>
    %188 = arith.negf %187 : vector<2x32xf32>
    %189 = math.exp %188 : vector<2x32xf32>
    %cst_35 = arith.constant 1.000000e+00 : f32
    %190 = vector.broadcast %cst_35 : f32 to vector<2x32xf32>
    %191 = arith.addf %190, %189 : vector<2x32xf32>
    %192 = arith.divf %190, %191 : vector<2x32xf32>
    %193 = vector.extract_strided_slice %186 {offsets = [0, 32], sizes = [2, 32], strides = [1, 1]} : vector<2x128xf32> to vector<2x32xf32>
    %194 = arith.negf %193 : vector<2x32xf32>
    %195 = math.exp %194 : vector<2x32xf32>
    %cst_36 = arith.constant 1.000000e+00 : f32
    %196 = vector.broadcast %cst_36 : f32 to vector<2x32xf32>
    %197 = arith.addf %196, %195 : vector<2x32xf32>
    %198 = arith.divf %196, %197 : vector<2x32xf32>
    %199 = vector.extract_strided_slice %186 {offsets = [0, 64], sizes = [2, 32], strides = [1, 1]} : vector<2x128xf32> to vector<2x32xf32>
    %200 = math.tanh %199 : vector<2x32xf32>
    %201 = vector.extract_strided_slice %186 {offsets = [0, 96], sizes = [2, 32], strides = [1, 1]} : vector<2x128xf32> to vector<2x32xf32>
    %202 = arith.negf %201 : vector<2x32xf32>
    %203 = math.exp %202 : vector<2x32xf32>
    %cst_37 = arith.constant 1.000000e+00 : f32
    %204 = vector.broadcast %cst_37 : f32 to vector<2x32xf32>
    %205 = arith.addf %204, %203 : vector<2x32xf32>
    %206 = arith.divf %204, %205 : vector<2x32xf32>
    %207 = arith.mulf %198, %180 : vector<2x32xf32>
    %208 = arith.mulf %192, %200 : vector<2x32xf32>
    %209 = arith.addf %207, %208 : vector<2x32xf32>
    %210 = math.tanh %209 : vector<2x32xf32>
    %211 = arith.mulf %206, %210 : vector<2x32xf32>
    %212 = arith.addf %183, %211 : vector<2x32xf32>
    %213 = vector.extract_strided_slice %5 {offsets = [14, 0], sizes = [2, 128], strides = [1, 1]} : vector<16x128xf32> to vector<2x128xf32>
    %cst_38 = arith.constant dense<0.000000e+00> : vector<2x128xf32>
    %214 = tpu.matmul %211, %6, %cst_38 {dimension_numbers = #tpu.dot_dimension_numbers<[1], [0], [0], [1], [0, 0, 1, 1], [], []>} : vector<2x32xf32>, vector<32x128xf32>, vector<2x128xf32> -> vector<2x128xf32>
    %215 = arith.addf %213, %214 : vector<2x128xf32>
    %216 = vector.extract_strided_slice %215 {offsets = [0, 0], sizes = [2, 32], strides = [1, 1]} : vector<2x128xf32> to vector<2x32xf32>
    %217 = arith.negf %216 : vector<2x32xf32>
    %218 = math.exp %217 : vector<2x32xf32>
    %cst_39 = arith.constant 1.000000e+00 : f32
    %219 = vector.broadcast %cst_39 : f32 to vector<2x32xf32>
    %220 = arith.addf %219, %218 : vector<2x32xf32>
    %221 = arith.divf %219, %220 : vector<2x32xf32>
    %222 = vector.extract_strided_slice %215 {offsets = [0, 32], sizes = [2, 32], strides = [1, 1]} : vector<2x128xf32> to vector<2x32xf32>
    %223 = arith.negf %222 : vector<2x32xf32>
    %224 = math.exp %223 : vector<2x32xf32>
    %cst_40 = arith.constant 1.000000e+00 : f32
    %225 = vector.broadcast %cst_40 : f32 to vector<2x32xf32>
    %226 = arith.addf %225, %224 : vector<2x32xf32>
    %227 = arith.divf %225, %226 : vector<2x32xf32>
    %228 = vector.extract_strided_slice %215 {offsets = [0, 64], sizes = [2, 32], strides = [1, 1]} : vector<2x128xf32> to vector<2x32xf32>
    %229 = math.tanh %228 : vector<2x32xf32>
    %230 = vector.extract_strided_slice %215 {offsets = [0, 96], sizes = [2, 32], strides = [1, 1]} : vector<2x128xf32> to vector<2x32xf32>
    %231 = arith.negf %230 : vector<2x32xf32>
    %232 = math.exp %231 : vector<2x32xf32>
    %cst_41 = arith.constant 1.000000e+00 : f32
    %233 = vector.broadcast %cst_41 : f32 to vector<2x32xf32>
    %234 = arith.addf %233, %232 : vector<2x32xf32>
    %235 = arith.divf %233, %234 : vector<2x32xf32>
    %236 = arith.mulf %227, %209 : vector<2x32xf32>
    %237 = arith.mulf %221, %229 : vector<2x32xf32>
    %238 = arith.addf %236, %237 : vector<2x32xf32>
    %239 = math.tanh %238 : vector<2x32xf32>
    %240 = arith.mulf %235, %239 : vector<2x32xf32>
    %241 = arith.addf %212, %240 : vector<2x32xf32>
    %cst_42 = arith.constant 1.250000e-01 : f32
    %242 = vector.broadcast %cst_42 : f32 to vector<2x32xf32>
    %243 = arith.mulf %241, %242 : vector<2x32xf32>
    %c0_43 = arith.constant 0 : index
    %c0_44 = arith.constant 0 : index
    %244 = vector.load %arg4[%c0_43, %c0_44] : memref<1x32xf32, #tpu.memory_space<vmem>>, vector<1x32xf32>
    %245 = vector.broadcast %244 : vector<1x32xf32> to vector<2x32xf32>
    %246 = arith.mulf %243, %245 : vector<2x32xf32>
    %cst_45 = arith.constant dense<0.000000e+00> : vector<2xf32>
    %247 = vector.multi_reduction <add>, %246, %cst_45 [1] : vector<2x32xf32> to vector<2xf32>
    %248 = vector.shape_cast %247 : vector<2xf32> to vector<2x1xf32>
    %c0_46 = arith.constant 0 : index
    %c0_47 = arith.constant 0 : index
    %249 = vector.load %arg5[%c0_46, %c0_47] : memref<1x1xf32, #tpu.memory_space<vmem>>, vector<1x1xf32>
    %250 = vector.broadcast %249 : vector<1x1xf32> to vector<2x1xf32>
    %251 = arith.addf %248, %250 : vector<2x1xf32>
    %c0_48 = arith.constant 0 : index
    %c0_49 = arith.constant 0 : index
    %252 = vector.load %arg6[%c0_48, %c0_49] : memref<2x1xf32, #tpu.memory_space<vmem>>, vector<2x1xf32>
    tpu.vector_store %arg6[%c0_48, %c0_49], %251 {strides = array<i32>} : memref<2x1xf32, #tpu.memory_space<vmem>>, vector<2x1xf32>,
    return
  }
}

</mosaic_0001>

<llo_original>
// kernel: tpu_custom_call.1
$region0: #{tpu_custom_call.1}
  #allocation0 [shape = 'u32[]', space=smem, size = 0x4, offset = 0x4, fixed_abs, tag = 'smem constant byte address 0x4 - core index']
  #allocation1 [shape = 'u32[144,128]{1,0:T(1,128)}', space=vmem, size = 0x12000, scoped, tag = 'internal scratch']
  #allocation2 [shape = 'f32[1,1]{1,0:T(1,128)S(1)}', space=vmem, size = 0x200, scoped, tag = 'scoped memory for tpu_custom_call.1']
  %s0 = inlined_call_operand.hbm [shape: f32[16,200], index: 0, kind: input, shape index: {}]
  %s1 = inlined_call_operand.hbm [shape: f32[200,128], index: 1, kind: input, shape index: {}]
  %s2 = inlined_call_operand.hbm [shape: f32[32,128], index: 2, kind: input, shape index: {}]
  %s3 = inlined_call_operand.vmem [shape: f32[1,128], index: 3, kind: input, shape index: {}]
  %s4 = inlined_call_operand.vmem [shape: f32[1,32], index: 4, kind: input, shape index: {}]
  %s5 = inlined_call_operand.<no memory space> [shape: f32[1,1], index: 5, kind: input, shape index: {}]
  %s6 = inlined_call_operand.vmem [shape: f32[2,1], index: 6, kind: output, shape index: {}]
  %s7 = sld [smem:[#allocation0]]
  $region46: #{tpu_custom_call.1} parent=0
    _
  %s9 = ssub.s32 1, %s7
  %s10 = scalar_select 0, %s9, %s7
  %v11 = vstv %s5
  %12 = vst [vmem:[#allocation2] sm:$0x1] %v11
  $region1: #{tpu_custom_call.1} parent=0
    #allocation3 [shape = 'u8[16384]{0}', space=vmem, size = 0x4000, scoped, tag = 'input window, operand 0, single buffered']
    #allocation4 [shape = 's32[1]{0}', space=sflag, size = 0x4, scoped, tag = 'scoped memory for tpu_custom_call.1']
    #allocation5 [shape = 'u8[102400]{0}', space=vmem, size = 0x19000, scoped, tag = 'input window, operand 1, single buffered']
    #allocation6 [shape = 's32[1]{0}', space=sflag, size = 0x4, scoped, tag = 'scoped memory for tpu_custom_call.1']
    #allocation7 [shape = 'u8[16384]{0}', space=vmem, size = 0x4000, scoped, tag = 'input window, operand 2, single buffered']
    %13 = vsyncpa [#allocation4], 0
    %14 = vsyncpa [#allocation6], 0
    // Predicated region
    $region2: #{tpu_custom_call.1} parent=1 // pred_check
      _
    $region3: #{tpu_custom_call.1} parent=1 // pred_check_branch
      %16 = sbr.rel (0) target = $region5
    $region4: #{tpu_custom_call.1} parent=1 // pred_region
      %s18 = ssub.s32 512, 512
      %19 = vsyncadd [#allocation4], %s18
      %s20 = sshll.u32 [#allocation3], 4
      %s21 = int_to_ptr.vmem [resolvable:$true] %s20
      %26 = dma.hbm_to_vmem [thread:$0]  %s0, 512, %s21, [#allocation4], 256, 256, 16
    $region5: #{tpu_custom_call.1} parent=1 // pred_fallthru
      _
    // Predicated region
    $region6: #{tpu_custom_call.1} parent=1 // pred_check
      _
    $region7: #{tpu_custom_call.1} parent=1 // pred_check_branch
      %28 = sbr.rel (0) target = $region9
    $region8: #{tpu_custom_call.1} parent=1 // pred_region
      %s30 = ssub.s32 3200, 3200
      %31 = vsyncadd [#allocation6], %s30
      %s32 = sshll.u32 [#allocation5], 4
      %s33 = int_to_ptr.vmem [resolvable:$true] %s32
      %38 = dma.hbm_to_vmem [thread:$0]  %s1, 3200, %s33, [#allocation6], 128, 128, 8
    $region9: #{tpu_custom_call.1} parent=1 // pred_fallthru
      _
    // Predicated region
    $region10: #{tpu_custom_call.1} parent=1 // pred_check
      _
    $region11: #{tpu_custom_call.1} parent=1 // pred_check_branch
      %40 = sbr.rel (0) target = $region13
    $region12: #{tpu_custom_call.1} parent=1 // pred_region
      %s42 = ssub.s32 512, 512
      %43 = vsyncadd [#allocation6], %s42
      %s44 = sshll.u32 [#allocation7], 4
      %s45 = int_to_ptr.vmem [resolvable:$true] %s44
      %50 = dma.hbm_to_vmem [thread:$0]  %s2, 512, %s45, [#allocation6], 128, 128, 8
    $region13: #{tpu_custom_call.1} parent=1 // pred_fallthru
      _
    // Predicated region
    $region14: #{tpu_custom_call.1} parent=1 // pred_check
      _
    $region15: #{tpu_custom_call.1} parent=1 // pred_check_branch
      %52 = sbr.rel (0) target = $region17
    $region16: #{tpu_custom_call.1} parent=1 // pred_region
      _
    $region17: #{tpu_custom_call.1} parent=1 // pred_fallthru
      _
    // Predicated region
    $region18: #{tpu_custom_call.1} parent=1 // pred_check
      _
    $region19: #{tpu_custom_call.1} parent=1 // pred_check_branch
      %54 = sbr.rel (0) target = $region21
    $region20: #{tpu_custom_call.1} parent=1 // pred_region
      _
    $region21: #{tpu_custom_call.1} parent=1 // pred_fallthru
      _
    // Predicated region
    $region22: #{tpu_custom_call.1} parent=1 // pred_check
      _
    $region23: #{tpu_custom_call.1} parent=1 // pred_check_branch
      %56 = sbr.rel (0) target = $region25
    $region24: #{tpu_custom_call.1} parent=1 // pred_region
      _
    $region25: #{tpu_custom_call.1} parent=1 // pred_fallthru
      _
    // Predicated region
    $region26: #{tpu_custom_call.1} parent=1 // pred_check
      _
    $region27: #{tpu_custom_call.1} parent=1 // pred_check_branch
      %58 = sbr.rel (0) target = $region29
    $region28: #{tpu_custom_call.1} parent=1 // pred_region
      %59 = dma.done [#allocation4], 512
    $region29: #{tpu_custom_call.1} parent=1 // pred_fallthru
      _
    // Predicated region
    $region30: #{tpu_custom_call.1} parent=1 // pred_check
      _
    $region31: #{tpu_custom_call.1} parent=1 // pred_check_branch
      %61 = sbr.rel (0) target = $region33
    $region32: #{tpu_custom_call.1} parent=1 // pred_region
      %62 = dma.done [#allocation6], 3200
    $region33: #{tpu_custom_call.1} parent=1 // pred_fallthru
      _
    // Predicated region
    $region34: #{tpu_custom_call.1} parent=1 // pred_check
      _
    $region35: #{tpu_custom_call.1} parent=1 // pred_check_branch
      %64 = sbr.rel (0) target = $region37
    $region36: #{tpu_custom_call.1} parent=1 // pred_region
      %65 = dma.done [#allocation6], 512
    $region37: #{tpu_custom_call.1} parent=1 // pred_fallthru
      _
    %v66 = vld [vmem:[#allocation3] sm:$0xff]
    %v67 = vld [vmem:[#allocation3 + $0x8] sm:$0xff]
    %v68 = vld [vmem:[#allocation3 + $0x10] sm:$0xff]
    %v69 = vld [vmem:[#allocation3 + $0x18] sm:$0xff]
    %v70 = vld [vmem:[#allocation5] sm:$0xff]
    %v71 = vld [vmem:[#allocation5 + $0x8] sm:$0xff]
    %v72 = vld [vmem:[#allocation5 + $0x10] sm:$0xff]
    %v73 = vld [vmem:[#allocation5 + $0x18] sm:$0xff]
    %v74 = vld [vmem:[#allocation5 + $0x20] sm:$0xff]
    %v75 = vld [vmem:[#allocation5 + $0x28] sm:$0xff]
    %v76 = vld [vmem:[#allocation5 + $0x30] sm:$0xff]
    %v77 = vld [vmem:[#allocation5 + $0x38] sm:$0xff]
    %v78 = vld [vmem:[#allocation5 + $0x40] sm:$0xff]
    %v79 = vld [vmem:[#allocation5 + $0x48] sm:$0xff]
    %v80 = vld [vmem:[#allocation5 + $0x50] sm:$0xff]
    %v81 = vld [vmem:[#allocation5 + $0x58] sm:$0xff]
    %v82 = vld [vmem:[#allocation5 + $0x60] sm:$0xff]
    %v83 = vld [vmem:[#allocation5 + $0x68] sm:$0xff]
    %v84 = vld [vmem:[#allocation5 + $0x70] sm:$0xff]
    %v85 = vld [vmem:[#allocation5 + $0x78] sm:$0xff]
    %v86 = vld [vmem:[#allocation5 + $0x80] sm:$0xff]
    %v87 = vld [vmem:[#allocation5 + $0x88] sm:$0xff]
    %v88 = vld [vmem:[#allocation5 + $0x90] sm:$0xff]
    %v89 = vld [vmem:[#allocation5 + $0x98] sm:$0xff]
    %v90 = vld [vmem:[#allocation5 + $0xa0] sm:$0xff]
    %v91 = vld [vmem:[#allocation5 + $0xa8] sm:$0xff]
    %v92 = vld [vmem:[#allocation5 + $0xb0] sm:$0xff]
    %v93 = vld [vmem:[#allocation5 + $0xb8] sm:$0xff]
    %v94 = vld [vmem:[#allocation5 + $0xc0] sm:$0xff]
    %v95 = vld [vmem:[%s3] sm:$0x1]
    %v97 = vlaneseq
    %v98 = vshrl.u32 %v97, 7
    %v99 = vsub.s32 0, %v98
    %v100 = vrot.slane %v95, %v99
    %vm102 = vcmask 588800
    %v104 = vsel %vm102, %v67, 0
    %v107 = vsel %vm102, %v69, 0
    %109 = vmatprep.subr.mxu0 0.0
    %110 = vmatpush1.msra.mxu0 %v85
    %111 = vmatprep.subr.mxu0 0.0
    %112 = vmatpush1.msra.mxu0 %v84
    %113 = vmatprep.subr.mxu0 0.0
    %114 = vmatpush1.msra.mxu0 %v83
    %115 = vmatprep.subr.mxu0 0.0
    %116 = vmatpush1.msra.mxu0 %v82
    %117 = vmatprep.subr.mxu0 0.0
    %118 = vmatpush1.msra.mxu0 %v81
    %119 = vmatprep.subr.mxu0 0.0
    %120 = vmatpush1.msra.mxu0 %v80
    %121 = vmatprep.subr.mxu0 0.0
    %122 = vmatpush1.msra.mxu0 %v79
    %123 = vmatprep.subr.mxu0 0.0
    %124 = vmatpush1.msra.mxu0 %v78
    %125 = vmatprep.subr.mxu0 0.0
    %126 = vmatpush1.msra.mxu0 %v77
    %127 = vmatprep.subr.mxu0 0.0
    %128 = vmatpush1.msra.mxu0 %v76
    %129 = vmatprep.subr.mxu0 0.0
    %130 = vmatpush1.msra.mxu0 %v75
    %131 = vmatprep.subr.mxu0 0.0
    %132 = vmatpush1.msra.mxu0 %v74
    %133 = vmatprep.subr.mxu0 0.0
    %134 = vmatpush1.msra.mxu0 %v73
    %135 = vmatprep.subr.mxu0 0.0
    %136 = vmatpush1.msra.mxu0 %v72
    %137 = vmatprep.subr.mxu0 0.0
    %138 = vmatpush1.msra.mxu0 %v71
    %139 = vmatprep.subr.mxu0 0.0
    %140 = vmatpush1.msra.mxu0 %v70
    %141 = vmatprep.subr.mxu0 0.0
    %142 = vmatpush2.msra.mxu0 0.0
    %143 = vmatprep.subr.mxu0 0.0
    %144 = vmatpush2.msra.mxu0 0.0
    %145 = vmatprep.subr.mxu0 0.0
    %146 = vmatpush2.msra.mxu0 0.0
    %147 = vmatprep.subr.mxu0 0.0
    %148 = vmatpush2.msra.mxu0 0.0
    %149 = vmatprep.subr.mxu0 0.0
    %150 = vmatpush2.msra.mxu0 0.0
    %151 = vmatprep.subr.mxu0 0.0
    %152 = vmatpush2.msra.mxu0 0.0
    %153 = vmatprep.subr.mxu0 0.0
    %154 = vmatpush2.msra.mxu0 0.0
    %155 = vmatprep.subr.mxu0 0.0
    %156 = vmatpush2.msra.mxu0 %v94
    %157 = vmatprep.subr.mxu0 0.0
    %158 = vmatpush2.msra.mxu0 %v93
    %159 = vmatprep.subr.mxu0 0.0
    %160 = vmatpush2.msra.mxu0 %v92
    %161 = vmatprep.subr.mxu0 0.0
    %162 = vmatpush2.msra.mxu0 %v91
    %163 = vmatprep.subr.mxu0 0.0
    %164 = vmatpush2.msra.mxu0 %v90
    %165 = vmatprep.subr.mxu0 0.0
    %166 = vmatpush2.msra.mxu0 %v89
    %167 = vmatprep.subr.mxu0 0.0
    %168 = vmatpush2.msra.mxu0 %v88
    %169 = vmatprep.subr.mxu0 0.0
    %170 = vmatpush2.msra.mxu0 %v87
    %171 = vmatprep.subr.mxu0 0.0
    %172 = vmatpush2.msra.mxu0 %v86
    %173 = vmatprep.mubr.f32.mxu0 %v104
    %174 = vmatmul.mubr.f32.gmra.mxu0 %v66
    %v175 = vpop.f32.mrf.mxu0
    %v176 = vadd.f32 %v100, %v175
    %v177 = vpop.f32.mrf.mxu0
    %178 = vmatprep.mubr.f32.mxu0 %v107
    %179 = vmatmul.mubr.f32.gmra.mxu0 %v68
    %v180 = vpop.f32.mrf.mxu0
    %v181 = vadd.f32 %v100, %v180
    %v182 = vpop.f32.mrf.mxu0
    %183 = vdwg.mxu0
    %v184 = vld [vmem:[#allocation7] sm:$0xff]
    %v185 = vld [vmem:[#allocation7 + $0x8] sm:$0xff]
    %v186 = vld [vmem:[#allocation7 + $0x10] sm:$0xff]
    %v187 = vld [vmem:[#allocation7 + $0x18] sm:$0xff]
    %vm188 = vcmask 261120
    %v190 = vsel %vm188, 0.0, 0
    %192 = vmatprep.subr.mxu0 0.0
    %193 = vmatpush1.msra.mxu0 0.0
    %194 = vmatprep.subr.mxu0 0.0
    %195 = vmatpush1.msra.mxu0 0.0
    %196 = vmatprep.subr.mxu0 0.0
    %197 = vmatpush1.msra.mxu0 0.0
    %198 = vmatprep.subr.mxu0 0.0
    %199 = vmatpush1.msra.mxu0 0.0
    %200 = vmatprep.subr.mxu0 0.0
    %201 = vmatpush1.msra.mxu0 0.0
    %202 = vmatprep.subr.mxu0 0.0
    %203 = vmatpush1.msra.mxu0 0.0
    %204 = vmatprep.subr.mxu0 0.0
    %205 = vmatpush1.msra.mxu0 0.0
    %206 = vmatprep.subr.mxu0 0.0
    %207 = vmatpush1.msra.mxu0 0.0
    %208 = vmatprep.subr.mxu0 0.0
    %209 = vmatpush1.msra.mxu0 0.0
    %210 = vmatprep.subr.mxu0 0.0
    %211 = vmatpush1.msra.mxu0 0.0
    %212 = vmatprep.subr.mxu0 0.0
    %213 = vmatpush1.msra.mxu0 0.0
    %214 = vmatprep.subr.mxu0 0.0
    %215 = vmatpush1.msra.mxu0 0.0
    %216 = vmatprep.subr.mxu0 0.0
    %217 = vmatpush1.msra.mxu0 %v187
    %218 = vmatprep.subr.mxu0 0.0
    %219 = vmatpush1.msra.mxu0 %v186
    %220 = vmatprep.subr.mxu0 0.0
    %221 = vmatpush1.msra.mxu0 %v185
    %222 = vmatprep.subr.mxu0 0.0
    %223 = vmatpush1.msra.mxu0 %v184
    %224 = vmatprep.subr.mxu0 0.0
    %225 = vmatpush2.msra.mxu0 0.0
    %226 = vmatprep.subr.mxu0 0.0
    %227 = vmatpush2.msra.mxu0 0.0
    %228 = vmatprep.subr.mxu0 0.0
    %229 = vmatpush2.msra.mxu0 0.0
    %230 = vmatprep.subr.mxu0 0.0
    %231 = vmatpush2.msra.mxu0 0.0
    %232 = vmatprep.subr.mxu0 0.0
    %233 = vmatpush2.msra.mxu0 0.0
    %234 = vmatprep.subr.mxu0 0.0
    %235 = vmatpush2.msra.mxu0 0.0
    %236 = vmatprep.subr.mxu0 0.0
    %237 = vmatpush2.msra.mxu0 0.0
    %238 = vmatprep.subr.mxu0 0.0
    %239 = vmatpush2.msra.mxu0 0.0
    %240 = vmatprep.subr.mxu0 0.0
    %241 = vmatpush2.msra.mxu0 0.0
    %242 = vmatprep.subr.mxu0 0.0
    %243 = vmatpush2.msra.mxu0 0.0
    %244 = vmatprep.subr.mxu0 0.0
    %245 = vmatpush2.msra.mxu0 0.0
    %246 = vmatprep.subr.mxu0 0.0
    %247 = vmatpush2.msra.mxu0 0.0
    %248 = vmatprep.subr.mxu0 0.0
    %249 = vmatpush2.msra.mxu0 0.0
    %250 = vmatprep.subr.mxu0 0.0
    %251 = vmatpush2.msra.mxu0 0.0
    %252 = vmatprep.subr.mxu0 0.0
    %253 = vmatpush2.msra.mxu0 0.0
    %254 = vmatprep.subr.mxu0 0.0
    %255 = vmatpush2.msra.mxu0 0.0
    %256 = vmatprep.mubr.f32.mxu0 0.0
    %257 = vmatmul.mubr.f32.gmra.mxu0 %v190
    %v258 = vpop.f32.mrf.mxu0
    %v259 = vadd.f32 0.0, %v258
    %v260 = vpop.f32.mrf.mxu0
    %261 = vdwg.mxu0
    %v262 = vadd.f32 %v176, %v259
    %v263 = vxor.u32 %v262, 2147483648
    %v264 = vmul.f32 %v263, 1.442695
    %v265 = vpow.pop %v264
    %v266 = vadd.f32 %v265, 1.0
    %v267 = vrcp.pop %v266
    %v268 = vmul.f32 1.0, %v267
    %v269 = vtanh.pop %v262
    %v270 = vmul.f32 %v268, 0.0
    %272 = vrot.lane.b32.xlu0 %v269, 64
    %v273 = vpop.permute.xlu0 %272
    %v275 = vmul.f32 %v268, %v273
    %277 = vrot.lane.b32.xlu0 %v275, 32
    %v278 = vpop.permute.xlu0 %277
    %v280 = vadd.f32 %v270, %v278
    %v281 = vtanh.pop %v280
    %283 = vrot.lane.b32.xlu0 %v281, 64
    %v284 = vpop.permute.xlu0 %283
    %v286 = vmul.f32 %v268, %v284
    %v287 = vadd.f32 %v286, 0.0
    %289 = vrot.lane.b32.xlu0 %v286, 32
    %v290 = vpop.permute.xlu0 %289
    %v291 = vsel %vm188, %v290, 0
    %293 = vmatprep.subr.mxu0 0.0
    %294 = vmatpush1.msra.mxu0 0.0
    %295 = vmatprep.subr.mxu0 0.0
    %296 = vmatpush1.msra.mxu0 0.0
    %297 = vmatprep.subr.mxu0 0.0
    %298 = vmatpush1.msra.mxu0 0.0
    %299 = vmatprep.subr.mxu0 0.0
    %300 = vmatpush1.msra.mxu0 0.0
    %301 = vmatprep.subr.mxu0 0.0
    %302 = vmatpush1.msra.mxu0 0.0
    %303 = vmatprep.subr.mxu0 0.0
    %304 = vmatpush1.msra.mxu0 0.0
    %305 = vmatprep.subr.mxu0 0.0
    %306 = vmatpush1.msra.mxu0 0.0
    %307 = vmatprep.subr.mxu0 0.0
    %308 = vmatpush1.msra.mxu0 0.0
    %309 = vmatprep.subr.mxu0 0.0
    %310 = vmatpush1.msra.mxu0 0.0
    %311 = vmatprep.subr.mxu0 0.0
    %312 = vmatpush1.msra.mxu0 0.0
    %313 = vmatprep.subr.mxu0 0.0
    %314 = vmatpush1.msra.mxu0 0.0
    %315 = vmatprep.subr.mxu0 0.0
    %316 = vmatpush1.msra.mxu0 0.0
    %317 = vmatprep.subr.mxu0 0.0
    %318 = vmatpush1.msra.mxu0 %v187
    %319 = vmatprep.subr.mxu0 0.0
    %320 = vmatpush1.msra.mxu0 %v186
    %321 = vmatprep.subr.mxu0 0.0
    %322 = vmatpush1.msra.mxu0 %v185
    %323 = vmatprep.subr.mxu0 0.0
    %324 = vmatpush1.msra.mxu0 %v184
    %325 = vmatprep.subr.mxu0 0.0
    %326 = vmatpush2.msra.mxu0 0.0
    %327 = vmatprep.subr.mxu0 0.0
    %328 = vmatpush2.msra.mxu0 0.0
    %329 = vmatprep.subr.mxu0 0.0
    %330 = vmatpush2.msra.mxu0 0.0
    %331 = vmatprep.subr.mxu0 0.0
    %332 = vmatpush2.msra.mxu0 0.0
    %333 = vmatprep.subr.mxu0 0.0
    %334 = vmatpush2.msra.mxu0 0.0
    %335 = vmatprep.subr.mxu0 0.0
    %336 = vmatpush2.msra.mxu0 0.0
    %337 = vmatprep.subr.mxu0 0.0
    %338 = vmatpush2.msra.mxu0 0.0
    %339 = vmatprep.subr.mxu0 0.0
    %340 = vmatpush2.msra.mxu0 0.0
    %341 = vmatprep.subr.mxu0 0.0
    %342 = vmatpush2.msra.mxu0 0.0
    %343 = vmatprep.subr.mxu0 0.0
    %344 = vmatpush2.msra.mxu0 0.0
    %345 = vmatprep.subr.mxu0 0.0
    %346 = vmatpush2.msra.mxu0 0.0
    %347 = vmatprep.subr.mxu0 0.0
    %348 = vmatpush2.msra.mxu0 0.0
    %349 = vmatprep.subr.mxu0 0.0
    %350 = vmatpush2.msra.mxu0 0.0
    %351 = vmatprep.subr.mxu0 0.0
    %352 = vmatpush2.msra.mxu0 0.0
    %353 = vmatprep.subr.mxu0 0.0
    %354 = vmatpush2.msra.mxu0 0.0
    %355 = vmatprep.subr.mxu0 0.0
    %356 = vmatpush2.msra.mxu0 0.0
    %357 = vmatprep.mubr.f32.mxu0 0.0
    %358 = vmatmul.mubr.f32.gmra.mxu0 %v291
    %v359 = vpop.f32.mrf.mxu0
    %v360 = vadd.f32 0.0, %v359
    %v361 = vpop.f32.mrf.mxu0
    %362 = vdwg.mxu0
    %v364 = vrot.slane %v360, 6
    %v366 = vadd.f32 %v176, %v364
    %v367 = vxor.u32 %v366, 2147483648
    %v368 = vmul.f32 %v367, 1.442695
    %v369 = vpow.pop %v368
    %v370 = vadd.f32 %v369, 1.0
    %v371 = vrcp.pop %v370
    %v372 = vmul.f32 1.0, %v371
    %v373 = vtanh.pop %v366
    %v375 = vrot.slane %v280, 6
    %v377 = vmul.f32 %v372, %v375
    %379 = vrot.lane.b32.xlu0 %v373, 64
    %v380 = vpop.permute.xlu0 %379
    %v382 = vmul.f32 %v372, %v380
    %384 = vrot.lane.b32.xlu0 %v382, 32
    %v385 = vpop.permute.xlu0 %384
    %v387 = vadd.f32 %v377, %v385
    %v388 = vtanh.pop %v387
    %390 = vrot.lane.b32.xlu0 %v388, 64
    %v391 = vpop.permute.xlu0 %390
    %v393 = vmul.f32 %v372, %v391
    %v395 = vrot.slane %v393, 2
    %v397 = vadd.f32 %v287, %v395
    %398 = vrot.lane.b32.xlu0 %v395, 32
    %v399 = vpop.permute.xlu0 %398
    %v400 = vsel %vm188, %v399, 0
    %402 = vmatprep.subr.mxu0 0.0
    %403 = vmatpush1.msra.mxu0 0.0
    %404 = vmatprep.subr.mxu0 0.0
    %405 = vmatpush1.msra.mxu0 0.0
    %406 = vmatprep.subr.mxu0 0.0
    %407 = vmatpush1.msra.mxu0 0.0
    %408 = vmatprep.subr.mxu0 0.0
    %409 = vmatpush1.msra.mxu0 0.0
    %410 = vmatprep.subr.mxu0 0.0
    %411 = vmatpush1.msra.mxu0 0.0
    %412 = vmatprep.subr.mxu0 0.0
    %413 = vmatpush1.msra.mxu0 0.0
    %414 = vmatprep.subr.mxu0 0.0
    %415 = vmatpush1.msra.mxu0 0.0
    %416 = vmatprep.subr.mxu0 0.0
    %417 = vmatpush1.msra.mxu0 0.0
    %418 = vmatprep.subr.mxu0 0.0
    %419 = vmatpush1.msra.mxu0 0.0
    %420 = vmatprep.subr.mxu0 0.0
    %421 = vmatpush1.msra.mxu0 0.0
    %422 = vmatprep.subr.mxu0 0.0
    %423 = vmatpush1.msra.mxu0 0.0
    %424 = vmatprep.subr.mxu0 0.0
    %425 = vmatpush1.msra.mxu0 0.0
    %426 = vmatprep.subr.mxu0 0.0
    %427 = vmatpush1.msra.mxu0 %v187
    %428 = vmatprep.subr.mxu0 0.0
    %429 = vmatpush1.msra.mxu0 %v186
    %430 = vmatprep.subr.mxu0 0.0
    %431 = vmatpush1.msra.mxu0 %v185
    %432 = vmatprep.subr.mxu0 0.0
    %433 = vmatpush1.msra.mxu0 %v184
    %434 = vmatprep.subr.mxu0 0.0
    %435 = vmatpush2.msra.mxu0 0.0
    %436 = vmatprep.subr.mxu0 0.0
    %437 = vmatpush2.msra.mxu0 0.0
    %438 = vmatprep.subr.mxu0 0.0
    %439 = vmatpush2.msra.mxu0 0.0
    %440 = vmatprep.subr.mxu0 0.0
    %441 = vmatpush2.msra.mxu0 0.0
    %442 = vmatprep.subr.mxu0 0.0
    %443 = vmatpush2.msra.mxu0 0.0
    %444 = vmatprep.subr.mxu0 0.0
    %445 = vmatpush2.msra.mxu0 0.0
    %446 = vmatprep.subr.mxu0 0.0
    %447 = vmatpush2.msra.mxu0 0.0
    %448 = vmatprep.subr.mxu0 0.0
    %449 = vmatpush2.msra.mxu0 0.0
    %450 = vmatprep.subr.mxu0 0.0
    %451 = vmatpush2.msra.mxu0 0.0
    %452 = vmatprep.subr.mxu0 0.0
    %453 = vmatpush2.msra.mxu0 0.0
    %454 = vmatprep.subr.mxu0 0.0
    %455 = vmatpush2.msra.mxu0 0.0
    %456 = vmatprep.subr.mxu0 0.0
    %457 = vmatpush2.msra.mxu0 0.0
    %458 = vmatprep.subr.mxu0 0.0
    %459 = vmatpush2.msra.mxu0 0.0
    %460 = vmatprep.subr.mxu0 0.0
    %461 = vmatpush2.msra.mxu0 0.0
    %462 = vmatprep.subr.mxu0 0.0
    %463 = vmatpush2.msra.mxu0 0.0
    %464 = vmatprep.subr.mxu0 0.0
    %465 = vmatpush2.msra.mxu0 0.0
    %466 = vmatprep.mubr.f32.mxu0 0.0
    %467 = vmatmul.mubr.f32.gmra.mxu0 %v400
    %v468 = vpop.f32.mrf.mxu0
    %v469 = vadd.f32 0.0, %v468
    %v470 = vpop.f32.mrf.mxu0
    %471 = vdwg.mxu0
    %v473 = vrot.slane %v469, 4
    %v475 = vadd.f32 %v176, %v473
    %v476 = vxor.u32 %v475, 2147483648
    %v477 = vmul.f32 %v476, 1.442695
    %v478 = vpow.pop %v477
    %v479 = vadd.f32 %v478, 1.0
    %v480 = vrcp.pop %v479
    %v481 = vmul.f32 1.0, %v480
    %v482 = vtanh.pop %v475
    %v484 = vrot.slane %v387, 6
    %v486 = vmul.f32 %v481, %v484
    %488 = vrot.lane.b32.xlu0 %v482, 64
    %v489 = vpop.permute.xlu0 %488
    %v491 = vmul.f32 %v481, %v489
    %493 = vrot.lane.b32.xlu0 %v491, 32
    %v494 = vpop.permute.xlu0 %493
    %v496 = vadd.f32 %v486, %v494
    %v497 = vtanh.pop %v496
    %499 = vrot.lane.b32.xlu0 %v497, 64
    %v500 = vpop.permute.xlu0 %499
    %v502 = vmul.f32 %v481, %v500
    %v504 = vrot.slane %v502, 4
    %v506 = vadd.f32 %v397, %v504
    %507 = vrot.lane.b32.xlu0 %v504, 32
    %v508 = vpop.permute.xlu0 %507
    %v509 = vsel %vm188, %v508, 0
    %511 = vmatprep.subr.mxu0 0.0
    %512 = vmatpush1.msra.mxu0 0.0
    %513 = vmatprep.subr.mxu0 0.0
    %514 = vmatpush1.msra.mxu0 0.0
    %515 = vmatprep.subr.mxu0 0.0
    %516 = vmatpush1.msra.mxu0 0.0
    %517 = vmatprep.subr.mxu0 0.0
    %518 = vmatpush1.msra.mxu0 0.0
    %519 = vmatprep.subr.mxu0 0.0
    %520 = vmatpush1.msra.mxu0 0.0
    %521 = vmatprep.subr.mxu0 0.0
    %522 = vmatpush1.msra.mxu0 0.0
    %523 = vmatprep.subr.mxu0 0.0
    %524 = vmatpush1.msra.mxu0 0.0
    %525 = vmatprep.subr.mxu0 0.0
    %526 = vmatpush1.msra.mxu0 0.0
    %527 = vmatprep.subr.mxu0 0.0
    %528 = vmatpush1.msra.mxu0 0.0
    %529 = vmatprep.subr.mxu0 0.0
    %530 = vmatpush1.msra.mxu0 0.0
    %531 = vmatprep.subr.mxu0 0.0
    %532 = vmatpush1.msra.mxu0 0.0
    %533 = vmatprep.subr.mxu0 0.0
    %534 = vmatpush1.msra.mxu0 0.0
    %535 = vmatprep.subr.mxu0 0.0
    %536 = vmatpush1.msra.mxu0 %v187
    %537 = vmatprep.subr.mxu0 0.0
    %538 = vmatpush1.msra.mxu0 %v186
    %539 = vmatprep.subr.mxu0 0.0
    %540 = vmatpush1.msra.mxu0 %v185
    %541 = vmatprep.subr.mxu0 0.0
    %542 = vmatpush1.msra.mxu0 %v184
    %543 = vmatprep.subr.mxu0 0.0
    %544 = vmatpush2.msra.mxu0 0.0
    %545 = vmatprep.subr.mxu0 0.0
    %546 = vmatpush2.msra.mxu0 0.0
    %547 = vmatprep.subr.mxu0 0.0
    %548 = vmatpush2.msra.mxu0 0.0
    %549 = vmatprep.subr.mxu0 0.0
    %550 = vmatpush2.msra.mxu0 0.0
    %551 = vmatprep.subr.mxu0 0.0
    %552 = vmatpush2.msra.mxu0 0.0
    %553 = vmatprep.subr.mxu0 0.0
    %554 = vmatpush2.msra.mxu0 0.0
    %555 = vmatprep.subr.mxu0 0.0
    %556 = vmatpush2.msra.mxu0 0.0
    %557 = vmatprep.subr.mxu0 0.0
    %558 = vmatpush2.msra.mxu0 0.0
    %559 = vmatprep.subr.mxu0 0.0
    %560 = vmatpush2.msra.mxu0 0.0
    %561 = vmatprep.subr.mxu0 0.0
    %562 = vmatpush2.msra.mxu0 0.0
    %563 = vmatprep.subr.mxu0 0.0
    %564 = vmatpush2.msra.mxu0 0.0
    %565 = vmatprep.subr.mxu0 0.0
    %566 = vmatpush2.msra.mxu0 0.0
    %567 = vmatprep.subr.mxu0 0.0
    %568 = vmatpush2.msra.mxu0 0.0
    %569 = vmatprep.subr.mxu0 0.0
    %570 = vmatpush2.msra.mxu0 0.0
    %571 = vmatprep.subr.mxu0 0.0
    %572 = vmatpush2.msra.mxu0 0.0
    %573 = vmatprep.subr.mxu0 0.0
    %574 = vmatpush2.msra.mxu0 0.0
    %575 = vmatprep.mubr.f32.mxu0 0.0
    %576 = vmatmul.mubr.f32.gmra.mxu0 %v509
    %v577 = vpop.f32.mrf.mxu0
    %v578 = vadd.f32 0.0, %v577
    %v579 = vpop.f32.mrf.mxu0
    %580 = vdwg.mxu0
    %v582 = vrot.slane %v578, 2
    %v584 = vadd.f32 %v176, %v582
    %v585 = vxor.u32 %v584, 2147483648
    %v586 = vmul.f32 %v585, 1.442695
    %v587 = vpow.pop %v586
    %v588 = vadd.f32 %v587, 1.0
    %v589 = vrcp.pop %v588
    %v590 = vmul.f32 1.0, %v589
    %v591 = vtanh.pop %v584
    %v593 = vrot.slane %v496, 6
    %v595 = vmul.f32 %v590, %v593
    %597 = vrot.lane.b32.xlu0 %v591, 64
    %v598 = vpop.permute.xlu0 %597
    %v600 = vmul.f32 %v590, %v598
    %602 = vrot.lane.b32.xlu0 %v600, 32
    %v603 = vpop.permute.xlu0 %602
    %v605 = vadd.f32 %v595, %v603
    %v606 = vtanh.pop %v605
    %608 = vrot.lane.b32.xlu0 %v606, 64
    %v609 = vpop.permute.xlu0 %608
    %v611 = vmul.f32 %v590, %v609
    %v613 = vrot.slane %v611, 6
    %v615 = vadd.f32 %v506, %v613
    %616 = vrot.lane.b32.xlu0 %v613, 32
    %v617 = vpop.permute.xlu0 %616
    %v618 = vsel %vm188, %v617, 0
    %620 = vmatprep.subr.mxu0 0.0
    %621 = vmatpush1.msra.mxu0 0.0
    %622 = vmatprep.subr.mxu0 0.0
    %623 = vmatpush1.msra.mxu0 0.0
    %624 = vmatprep.subr.mxu0 0.0
    %625 = vmatpush1.msra.mxu0 0.0
    %626 = vmatprep.subr.mxu0 0.0
    %627 = vmatpush1.msra.mxu0 0.0
    %628 = vmatprep.subr.mxu0 0.0
    %629 = vmatpush1.msra.mxu0 0.0
    %630 = vmatprep.subr.mxu0 0.0
    %631 = vmatpush1.msra.mxu0 0.0
    %632 = vmatprep.subr.mxu0 0.0
    %633 = vmatpush1.msra.mxu0 0.0
    %634 = vmatprep.subr.mxu0 0.0
    %635 = vmatpush1.msra.mxu0 0.0
    %636 = vmatprep.subr.mxu0 0.0
    %637 = vmatpush1.msra.mxu0 0.0
    %638 = vmatprep.subr.mxu0 0.0
    %639 = vmatpush1.msra.mxu0 0.0
    %640 = vmatprep.subr.mxu0 0.0
    %641 = vmatpush1.msra.mxu0 0.0
    %642 = vmatprep.subr.mxu0 0.0
    %643 = vmatpush1.msra.mxu0 0.0
    %644 = vmatprep.subr.mxu0 0.0
    %645 = vmatpush1.msra.mxu0 %v187
    %646 = vmatprep.subr.mxu0 0.0
    %647 = vmatpush1.msra.mxu0 %v186
    %648 = vmatprep.subr.mxu0 0.0
    %649 = vmatpush1.msra.mxu0 %v185
    %650 = vmatprep.subr.mxu0 0.0
    %651 = vmatpush1.msra.mxu0 %v184
    %652 = vmatprep.subr.mxu0 0.0
    %653 = vmatpush2.msra.mxu0 0.0
    %654 = vmatprep.subr.mxu0 0.0
    %655 = vmatpush2.msra.mxu0 0.0
    %656 = vmatprep.subr.mxu0 0.0
    %657 = vmatpush2.msra.mxu0 0.0
    %658 = vmatprep.subr.mxu0 0.0
    %659 = vmatpush2.msra.mxu0 0.0
    %660 = vmatprep.subr.mxu0 0.0
    %661 = vmatpush2.msra.mxu0 0.0
    %662 = vmatprep.subr.mxu0 0.0
    %663 = vmatpush2.msra.mxu0 0.0
    %664 = vmatprep.subr.mxu0 0.0
    %665 = vmatpush2.msra.mxu0 0.0
    %666 = vmatprep.subr.mxu0 0.0
    %667 = vmatpush2.msra.mxu0 0.0
    %668 = vmatprep.subr.mxu0 0.0
    %669 = vmatpush2.msra.mxu0 0.0
    %670 = vmatprep.subr.mxu0 0.0
    %671 = vmatpush2.msra.mxu0 0.0
    %672 = vmatprep.subr.mxu0 0.0
    %673 = vmatpush2.msra.mxu0 0.0
    %674 = vmatprep.subr.mxu0 0.0
    %675 = vmatpush2.msra.mxu0 0.0
    %676 = vmatprep.subr.mxu0 0.0
    %677 = vmatpush2.msra.mxu0 0.0
    %678 = vmatprep.subr.mxu0 0.0
    %679 = vmatpush2.msra.mxu0 0.0
    %680 = vmatprep.subr.mxu0 0.0
    %681 = vmatpush2.msra.mxu0 0.0
    %682 = vmatprep.subr.mxu0 0.0
    %683 = vmatpush2.msra.mxu0 0.0
    %684 = vmatprep.mubr.f32.mxu0 0.0
    %685 = vmatmul.mubr.f32.gmra.mxu0 %v618
    %v686 = vpop.f32.mrf.mxu0
    %v687 = vadd.f32 0.0, %v686
    %v688 = vpop.f32.mrf.mxu0
    %689 = vdwg.mxu0
    %v690 = vadd.f32 %v181, %v687
    %v691 = vxor.u32 %v690, 2147483648
    %v692 = vmul.f32 %v691, 1.442695
    %v693 = vpow.pop %v692
    %v694 = vadd.f32 %v693, 1.0
    %v695 = vrcp.pop %v694
    %v696 = vmul.f32 1.0, %v695
    %v697 = vtanh.pop %v690
    %v699 = vrot.slane %v605, 6
    %v701 = vmul.f32 %v696, %v699
    %703 = vrot.lane.b32.xlu0 %v697, 64
    %v704 = vpop.permute.xlu0 %703
    %v706 = vmul.f32 %v696, %v704
    %708 = vrot.lane.b32.xlu0 %v706, 32
    %v709 = vpop.permute.xlu0 %708
    %v711 = vadd.f32 %v701, %v709
    %v712 = vtanh.pop %v711
    %714 = vrot.lane.b32.xlu0 %v712, 64
    %v715 = vpop.permute.xlu0 %714
    %v717 = vmul.f32 %v696, %v715
    %v718 = vadd.f32 %v615, %v717
    %720 = vrot.lane.b32.xlu0 %v717, 32
    %v721 = vpop.permute.xlu0 %720
    %v722 = vsel %vm188, %v721, 0
    %724 = vmatprep.subr.mxu0 0.0
    %725 = vmatpush1.msra.mxu0 0.0
    %726 = vmatprep.subr.mxu0 0.0
    %727 = vmatpush1.msra.mxu0 0.0
    %728 = vmatprep.subr.mxu0 0.0
    %729 = vmatpush1.msra.mxu0 0.0
    %730 = vmatprep.subr.mxu0 0.0
    %731 = vmatpush1.msra.mxu0 0.0
    %732 = vmatprep.subr.mxu0 0.0
    %733 = vmatpush1.msra.mxu0 0.0
    %734 = vmatprep.subr.mxu0 0.0
    %735 = vmatpush1.msra.mxu0 0.0
    %736 = vmatprep.subr.mxu0 0.0
    %737 = vmatpush1.msra.mxu0 0.0
    %738 = vmatprep.subr.mxu0 0.0
    %739 = vmatpush1.msra.mxu0 0.0
    %740 = vmatprep.subr.mxu0 0.0
    %741 = vmatpush1.msra.mxu0 0.0
    %742 = vmatprep.subr.mxu0 0.0
    %743 = vmatpush1.msra.mxu0 0.0
    %744 = vmatprep.subr.mxu0 0.0
    %745 = vmatpush1.msra.mxu0 0.0
    %746 = vmatprep.subr.mxu0 0.0
    %747 = vmatpush1.msra.mxu0 0.0
    %748 = vmatprep.subr.mxu0 0.0
    %749 = vmatpush1.msra.mxu0 %v187
    %750 = vmatprep.subr.mxu0 0.0
    %751 = vmatpush1.msra.mxu0 %v186
    %752 = vmatprep.subr.mxu0 0.0
    %753 = vmatpush1.msra.mxu0 %v185
    %754 = vmatprep.subr.mxu0 0.0
    %755 = vmatpush1.msra.mxu0 %v184
    %756 = vmatprep.subr.mxu0 0.0
    %757 = vmatpush2.msra.mxu0 0.0
    %758 = vmatprep.subr.mxu0 0.0
    %759 = vmatpush2.msra.mxu0 0.0
    %760 = vmatprep.subr.mxu0 0.0
    %761 = vmatpush2.msra.mxu0 0.0
    %762 = vmatprep.subr.mxu0 0.0
    %763 = vmatpush2.msra.mxu0 0.0
    %764 = vmatprep.subr.mxu0 0.0
    %765 = vmatpush2.msra.mxu0 0.0
    %766 = vmatprep.subr.mxu0 0.0
    %767 = vmatpush2.msra.mxu0 0.0
    %768 = vmatprep.subr.mxu0 0.0
    %769 = vmatpush2.msra.mxu0 0.0
    %770 = vmatprep.subr.mxu0 0.0
    %771 = vmatpush2.msra.mxu0 0.0
    %772 = vmatprep.subr.mxu0 0.0
    %773 = vmatpush2.msra.mxu0 0.0
    %774 = vmatprep.subr.mxu0 0.0
    %775 = vmatpush2.msra.mxu0 0.0
    %776 = vmatprep.subr.mxu0 0.0
    %777 = vmatpush2.msra.mxu0 0.0
    %778 = vmatprep.subr.mxu0 0.0
    %779 = vmatpush2.msra.mxu0 0.0
    %780 = vmatprep.subr.mxu0 0.0
    %781 = vmatpush2.msra.mxu0 0.0
    %782 = vmatprep.subr.mxu0 0.0
    %783 = vmatpush2.msra.mxu0 0.0
    %784 = vmatprep.subr.mxu0 0.0
    %785 = vmatpush2.msra.mxu0 0.0
    %786 = vmatprep.subr.mxu0 0.0
    %787 = vmatpush2.msra.mxu0 0.0
    %788 = vmatprep.mubr.f32.mxu0 0.0
    %789 = vmatmul.mubr.f32.gmra.mxu0 %v722
    %v790 = vpop.f32.mrf.mxu0
    %v791 = vadd.f32 0.0, %v790
    %v792 = vpop.f32.mrf.mxu0
    %793 = vdwg.mxu0
    %v795 = vrot.slane %v791, 6
    %v797 = vadd.f32 %v181, %v795
    %v798 = vxor.u32 %v797, 2147483648
    %v799 = vmul.f32 %v798, 1.442695
    %v800 = vpow.pop %v799
    %v801 = vadd.f32 %v800, 1.0
    %v802 = vrcp.pop %v801
    %v803 = vmul.f32 1.0, %v802
    %v804 = vtanh.pop %v797
    %v806 = vrot.slane %v711, 6
    %v808 = vmul.f32 %v803, %v806
    %810 = vrot.lane.b32.xlu0 %v804, 64
    %v811 = vpop.permute.xlu0 %810
    %v813 = vmul.f32 %v803, %v811
    %815 = vrot.lane.b32.xlu0 %v813, 32
    %v816 = vpop.permute.xlu0 %815
    %v818 = vadd.f32 %v808, %v816
    %v819 = vtanh.pop %v818
    %821 = vrot.lane.b32.xlu0 %v819, 64
    %v822 = vpop.permute.xlu0 %821
    %v824 = vmul.f32 %v803, %v822
    %v826 = vrot.slane %v824, 2
    %v828 = vadd.f32 %v718, %v826
    %829 = vrot.lane.b32.xlu0 %v826, 32
    %v830 = vpop.permute.xlu0 %829
    %v831 = vsel %vm188, %v830, 0
    %833 = vmatprep.subr.mxu0 0.0
    %834 = vmatpush1.msra.mxu0 0.0
    %835 = vmatprep.subr.mxu0 0.0
    %836 = vmatpush1.msra.mxu0 0.0
    %837 = vmatprep.subr.mxu0 0.0
    %838 = vmatpush1.msra.mxu0 0.0
    %839 = vmatprep.subr.mxu0 0.0
    %840 = vmatpush1.msra.mxu0 0.0
    %841 = vmatprep.subr.mxu0 0.0
    %842 = vmatpush1.msra.mxu0 0.0
    %843 = vmatprep.subr.mxu0 0.0
    %844 = vmatpush1.msra.mxu0 0.0
    %845 = vmatprep.subr.mxu0 0.0
    %846 = vmatpush1.msra.mxu0 0.0
    %847 = vmatprep.subr.mxu0 0.0
    %848 = vmatpush1.msra.mxu0 0.0
    %849 = vmatprep.subr.mxu0 0.0
    %850 = vmatpush1.msra.mxu0 0.0
    %851 = vmatprep.subr.mxu0 0.0
    %852 = vmatpush1.msra.mxu0 0.0
    %853 = vmatprep.subr.mxu0 0.0
    %854 = vmatpush1.msra.mxu0 0.0
    %855 = vmatprep.subr.mxu0 0.0
    %856 = vmatpush1.msra.mxu0 0.0
    %857 = vmatprep.subr.mxu0 0.0
    %858 = vmatpush1.msra.mxu0 %v187
    %859 = vmatprep.subr.mxu0 0.0
    %860 = vmatpush1.msra.mxu0 %v186
    %861 = vmatprep.subr.mxu0 0.0
    %862 = vmatpush1.msra.mxu0 %v185
    %863 = vmatprep.subr.mxu0 0.0
    %864 = vmatpush1.msra.mxu0 %v184
    %865 = vmatprep.subr.mxu0 0.0
    %866 = vmatpush2.msra.mxu0 0.0
    %867 = vmatprep.subr.mxu0 0.0
    %868 = vmatpush2.msra.mxu0 0.0
    %869 = vmatprep.subr.mxu0 0.0
    %870 = vmatpush2.msra.mxu0 0.0
    %871 = vmatprep.subr.mxu0 0.0
    %872 = vmatpush2.msra.mxu0 0.0
    %873 = vmatprep.subr.mxu0 0.0
    %874 = vmatpush2.msra.mxu0 0.0
    %875 = vmatprep.subr.mxu0 0.0
    %876 = vmatpush2.msra.mxu0 0.0
    %877 = vmatprep.subr.mxu0 0.0
    %878 = vmatpush2.msra.mxu0 0.0
    %879 = vmatprep.subr.mxu0 0.0
    %880 = vmatpush2.msra.mxu0 0.0
    %881 = vmatprep.subr.mxu0 0.0
    %882 = vmatpush2.msra.mxu0 0.0
    %883 = vmatprep.subr.mxu0 0.0
    %884 = vmatpush2.msra.mxu0 0.0
    %885 = vmatprep.subr.mxu0 0.0
    %886 = vmatpush2.msra.mxu0 0.0
    %887 = vmatprep.subr.mxu0 0.0
    %888 = vmatpush2.msra.mxu0 0.0
    %889 = vmatprep.subr.mxu0 0.0
    %890 = vmatpush2.msra.mxu0 0.0
    %891 = vmatprep.subr.mxu0 0.0
    %892 = vmatpush2.msra.mxu0 0.0
    %893 = vmatprep.subr.mxu0 0.0
    %894 = vmatpush2.msra.mxu0 0.0
    %895 = vmatprep.subr.mxu0 0.0
    %896 = vmatpush2.msra.mxu0 0.0
    %897 = vmatprep.mubr.f32.mxu0 0.0
    %898 = vmatmul.mubr.f32.gmra.mxu0 %v831
    %v899 = vpop.f32.mrf.mxu0
    %v900 = vadd.f32 0.0, %v899
    %v901 = vpop.f32.mrf.mxu0
    %902 = vdwg.mxu0
    %v904 = vrot.slane %v900, 4
    %v906 = vadd.f32 %v181, %v904
    %v907 = vxor.u32 %v906, 2147483648
    %v908 = vmul.f32 %v907, 1.442695
    %v909 = vpow.pop %v908
    %v910 = vadd.f32 %v909, 1.0
    %v911 = vrcp.pop %v910
    %v912 = vmul.f32 1.0, %v911
    %v913 = vtanh.pop %v906
    %v915 = vrot.slane %v818, 6
    %v917 = vmul.f32 %v912, %v915
    %919 = vrot.lane.b32.xlu0 %v913, 64
    %v920 = vpop.permute.xlu0 %919
    %v922 = vmul.f32 %v912, %v920
    %924 = vrot.lane.b32.xlu0 %v922, 32
    %v925 = vpop.permute.xlu0 %924
    %v927 = vadd.f32 %v917, %v925
    %v928 = vtanh.pop %v927
    %930 = vrot.lane.b32.xlu0 %v928, 64
    %v931 = vpop.permute.xlu0 %930
    %v933 = vmul.f32 %v912, %v931
    %v935 = vrot.slane %v933, 4
    %v937 = vadd.f32 %v828, %v935
    %938 = vrot.lane.b32.xlu0 %v935, 32
    %v939 = vpop.permute.xlu0 %938
    %v940 = vsel %vm188, %v939, 0
    %942 = vmatprep.subr.mxu0 0.0
    %943 = vmatpush1.msra.mxu0 0.0
    %944 = vmatprep.subr.mxu0 0.0
    %945 = vmatpush1.msra.mxu0 0.0
    %946 = vmatprep.subr.mxu0 0.0
    %947 = vmatpush1.msra.mxu0 0.0
    %948 = vmatprep.subr.mxu0 0.0
    %949 = vmatpush1.msra.mxu0 0.0
    %950 = vmatprep.subr.mxu0 0.0
    %951 = vmatpush1.msra.mxu0 0.0
    %952 = vmatprep.subr.mxu0 0.0
    %953 = vmatpush1.msra.mxu0 0.0
    %954 = vmatprep.subr.mxu0 0.0
    %955 = vmatpush1.msra.mxu0 0.0
    %956 = vmatprep.subr.mxu0 0.0
    %957 = vmatpush1.msra.mxu0 0.0
    %958 = vmatprep.subr.mxu0 0.0
    %959 = vmatpush1.msra.mxu0 0.0
    %960 = vmatprep.subr.mxu0 0.0
    %961 = vmatpush1.msra.mxu0 0.0
    %962 = vmatprep.subr.mxu0 0.0
    %963 = vmatpush1.msra.mxu0 0.0
    %964 = vmatprep.subr.mxu0 0.0
    %965 = vmatpush1.msra.mxu0 0.0
    %966 = vmatprep.subr.mxu0 0.0
    %967 = vmatpush1.msra.mxu0 %v187
    %968 = vmatprep.subr.mxu0 0.0
    %969 = vmatpush1.msra.mxu0 %v186
    %970 = vmatprep.subr.mxu0 0.0
    %971 = vmatpush1.msra.mxu0 %v185
    %972 = vmatprep.subr.mxu0 0.0
    %973 = vmatpush1.msra.mxu0 %v184
    %974 = vmatprep.subr.mxu0 0.0
    %975 = vmatpush2.msra.mxu0 0.0
    %976 = vmatprep.subr.mxu0 0.0
    %977 = vmatpush2.msra.mxu0 0.0
    %978 = vmatprep.subr.mxu0 0.0
    %979 = vmatpush2.msra.mxu0 0.0
    %980 = vmatprep.subr.mxu0 0.0
    %981 = vmatpush2.msra.mxu0 0.0
    %982 = vmatprep.subr.mxu0 0.0
    %983 = vmatpush2.msra.mxu0 0.0
    %984 = vmatprep.subr.mxu0 0.0
    %985 = vmatpush2.msra.mxu0 0.0
    %986 = vmatprep.subr.mxu0 0.0
    %987 = vmatpush2.msra.mxu0 0.0
    %988 = vmatprep.subr.mxu0 0.0
    %989 = vmatpush2.msra.mxu0 0.0
    %990 = vmatprep.subr.mxu0 0.0
    %991 = vmatpush2.msra.mxu0 0.0
    %992 = vmatprep.subr.mxu0 0.0
    %993 = vmatpush2.msra.mxu0 0.0
    %994 = vmatprep.subr.mxu0 0.0
    %995 = vmatpush2.msra.mxu0 0.0
    %996 = vmatprep.subr.mxu0 0.0
    %997 = vmatpush2.msra.mxu0 0.0
    %998 = vmatprep.subr.mxu0 0.0
    %999 = vmatpush2.msra.mxu0 0.0
    %1000 = vmatprep.subr.mxu0 0.0
    %1001 = vmatpush2.msra.mxu0 0.0
    %1002 = vmatprep.subr.mxu0 0.0
    %1003 = vmatpush2.msra.mxu0 0.0
    %1004 = vmatprep.subr.mxu0 0.0
    %1005 = vmatpush2.msra.mxu0 0.0
    %1006 = vmatprep.mubr.f32.mxu0 0.0
    %1007 = vmatmul.mubr.f32.gmra.mxu0 %v940
    %v1008 = vpop.f32.mrf.mxu0
    %v1009 = vadd.f32 0.0, %v1008
    %v1010 = vpop.f32.mrf.mxu0
    %1011 = vdwg.mxu0
    %v1013 = vrot.slane %v1009, 2
    %v1015 = vadd.f32 %v181, %v1013
    %v1016 = vxor.u32 %v1015, 2147483648
    %v1017 = vmul.f32 %v1016, 1.442695
    %v1018 = vpow.pop %v1017
    %v1019 = vadd.f32 %v1018, 1.0
    %v1020 = vrcp.pop %v1019
    %v1021 = vmul.f32 1.0, %v1020
    %v1022 = vtanh.pop %v1015
    %v1024 = vrot.slane %v927, 6
    %v1026 = vmul.f32 %v1021, %v1024
    %1028 = vrot.lane.b32.xlu0 %v1022, 64
    %v1029 = vpop.permute.xlu0 %1028
    %v1031 = vmul.f32 %v1021, %v1029
    %1033 = vrot.lane.b32.xlu0 %v1031, 32
    %v1034 = vpop.permute.xlu0 %1033
    %v1036 = vadd.f32 %v1026, %v1034
    %v1037 = vtanh.pop %v1036
    %1039 = vrot.lane.b32.xlu0 %v1037, 64
    %v1040 = vpop.permute.xlu0 %1039
    %v1042 = vmul.f32 %v1021, %v1040
    %v1044 = vrot.slane %v1042, 6
    %v1046 = vadd.f32 %v937, %v1044
    %v1047 = vmul.f32 %v1046, 0.125
    %v1048 = vld [vmem:[%s4] sm:$0x1]
    %v1050 = vlaneseq
    %v1051 = vshrl.u32 %v1050, 7
    %v1052 = vsub.s32 0, %v1051
    %v1053 = vrot.slane %v1048, %v1052
    %1054 = vrot.lane.b32.xlu0 %v1053, 96
    %v1055 = vpop.permute.xlu0 %1054
    %v1057 = vmul.f32 %v1047, %v1055
    %1059 = vrot.lane.b32.xlu0 %v1057, 32
    %v1060 = vpop.permute.xlu0 %1059
    %vm1062 = vcmask 254976
    %v1063 = vsel %vm1062, %v1060, 0.0
    %1064 = vadd.xlane.f32.xlu0 %v1063
    %v1065 = vpop.xlane.xlu0 %1064
    %v1066 = vld [vmem:[#allocation2] sm:$0x1]
    %v1068 = vlaneseq
    %v1069 = vshrl.u32 %v1068, 7
    %v1070 = vsub.s32 0, %v1069
    %v1071 = vrot.slane %v1066, %v1070
    %v1073 = vadd.f32 %v1065, %v1071
    %vm1074 = vcmask 1024
    %1075 = vst.msk [vmem:[%s6] sm:$0x3] %vm1074, %v1073
    // Predicated region
    $region38: #{tpu_custom_call.1} parent=1 // pred_check
      _
    $region39: #{tpu_custom_call.1} parent=1 // pred_check_branch
      %1077 = sbr.rel (0) target = $region41
    $region40: #{tpu_custom_call.1} parent=1 // pred_region
      _
    $region41: #{tpu_custom_call.1} parent=1 // pred_fallthru
      _
    // Predicated region
    $region42: #{tpu_custom_call.1} parent=1 // pred_check
      _
    $region43: #{tpu_custom_call.1} parent=1 // pred_check_branch
      %1079 = sbr.rel (0) target = $region45
    $region44: #{tpu_custom_call.1} parent=1 // pred_region
      _
    $region45: #{tpu_custom_call.1} parent=1 // pred_fallthru
      _
    %1080 = vsyncpa [#allocation4], 1
    %1081 = vsyncpa [#allocation6], 1

</llo_original>
